<compile_context>
chip_gen: v5e
topology: v5e:2x2
jax: 0.10.0
libtpu: 0.0.40
codegen_flags: <defaults>
</compile_context>

<pallas_src>
import jax
import jax.numpy as jnp
from jax.experimental import pallas as pl
from jax.experimental.pallas import tpu as pltpu


def _attention_kernel(ht_ref, att_ref, ct_ref, score_ref):
    # ht_ref:    (BB, T, E)  VMEM
    # att_ref:   (1, E)      VMEM (resident across grid steps)
    # ct_ref:    (BB, E)     VMEM output (lane-dense in E)
    # score_ref: (BB, T)     VMEM output (lane-dense in T)
    ht = ht_ref[...]                                 # (BB, T, E)
    att_row = att_ref[...].reshape(1, 1, -1)         # (1, 1, E), hoisted once

    # Attention logits on the VPU/XLU: elementwise mul + reduce over E -> (BB, T).
    s = jnp.sum(ht * att_row, axis=-1)

    # Numerically-stable softmax over the sequence (T) axis.
    m = jnp.max(s, axis=-1, keepdims=True)
    e = jnp.exp(s - m)
    denom = jnp.sum(e, axis=-1, keepdims=True)
    # Exact divide: HBM-bound kernel, so exactness is free and gives strict
    # parity with the PyTorch reference (rows sum to 1).
    p = e / denom                                    # (BB, T)

    score_ref[...] = p.astype(score_ref.dtype)

    # ct[b, :] = sum_t ht[b, t, :] * p[b, t]  -> (BB, E)
    ct = jnp.sum(ht * p[:, :, None], axis=1)
    ct_ref[...] = ct.astype(ct_ref.dtype)


# Per-step ht block target: ~8 MiB keeps the ~0.35 us per-grid-step overhead
# below ~5% of step time even at v7x's ~3.2 TB/s/TC HBM bandwidth.
_TARGET_BLOCK_BYTES = 8 << 20
# Hard cap per block so 2x double-buffered blocks + in-body temporaries stay
# comfortably under v7x's 64 MiB physical VMEM.
_MAX_BLOCK_BYTES = 12 << 20


def _choose_block_batch(B, T, E, itemsize=4):
    """Pick a batch-block size: ~8 MiB of ht per grid step, VMEM-safe, >=2 steps
    for large batches (v7x megacore), sublane-aligned when BB >= 8."""
    row_bytes = T * E * itemsize

    if row_bytes > _TARGET_BLOCK_BYTES:
        # Even a single (T, E) row exceeds the target: stream one row per step.
        # TODO(synk): for T*E*4 >> VMEM, tile the T axis with an online softmax.
        return 1

    bb = _TARGET_BLOCK_BYTES // row_bytes
    if bb >= B:
        bb = B

    # Keep >= 2 grid steps when the batch is large enough so the "parallel"
    # grid axis can be sharded across v7x's two TensorCores and the pipeline
    # can overlap DMA with compute.
    if bb == B and B >= 16:
        bb = -(-B // 2)  # ceil(B/2)

    if bb >= 8:
        bb = (bb // 8) * 8                 # sublane-align (8, *) output blocks
    else:
        # Only BB == B (tiny batch, full-array block) or BB == 8 are cleanly
        # aligned; never force 8 rows if that would blow the VMEM budget.
        if B <= 8:
            bb = B
        elif 8 * row_bytes <= _MAX_BLOCK_BYTES:
            bb = 8
        else:
            bb = 1
    return max(1, min(bb, B))


def _vmem_limit_bytes(BB, T, E, itemsize=4):
    """Scoped-VMEM limit covering double-buffered blocks + temporaries."""
    ht_block = BB * T * E * itemsize
    out_blocks = BB * (T + E) * 4
    att_bytes = E * 4
    # 2x ht (double-buffered) + 2x outputs (double-buffered) + resident att
    # + ~1 ht block of headroom for in-body elementwise temporaries.
    need = 2 * ht_block + 2 * out_blocks + att_bytes + ht_block + (1 << 20)
    need = int(need * 1.25)
    # Floor at 32 MiB (cheap everywhere), cap below v7x's 64 MiB physical VMEM.
    return max(32 << 20, min(need, 56 << 20))


def attention_pool(ht, att):
    """ht: (B, T, E) f32, att: (E, 1) f32 -> (ct (B, E), score (B, T, 1))."""
    B, T, E = ht.shape
    assert att.shape == (E, 1)

    BB = _choose_block_batch(B, T, E)
    grid = (pl.cdiv(B, BB),)

    att_row = att.reshape(1, E)  # lane-dense weight layout

    grid_spec = pltpu.PrefetchScalarGridSpec(
        num_scalar_prefetch=0,
        grid=grid,
        in_specs=[
            pl.BlockSpec((BB, T, E), lambda b: (b, 0, 0)),
            pl.BlockSpec((1, E), lambda b: (0, 0)),      # resident, no re-DMA
        ],
        out_specs=[
            pl.BlockSpec((BB, E), lambda b: (b, 0)),
            pl.BlockSpec((BB, T), lambda b: (b, 0)),
        ],
    )

    cost = pl.CostEstimate(
        flops=4 * B * T * E,          # mul+add for logits, mul+add for pooling
        transcendentals=B * T,        # exp in the softmax
        bytes_accessed=4 * B * T * E + 4 * B * (T + E) + 4 * E,
    )

    ct, score = pl.pallas_call(
        _attention_kernel,
        out_shape=(
            jax.ShapeDtypeStruct((B, E), jnp.float32),
            jax.ShapeDtypeStruct((B, T), jnp.float32),
        ),
        grid_spec=grid_spec,
        compiler_params=pltpu.CompilerParams(
            dimension_semantics=("parallel",),
            vmem_limit_bytes=_vmem_limit_bytes(BB, T, E),
        ),
        cost_estimate=cost,
    )(ht, att_row)

    # Match PyTorch output shape for the score: (B, T, 1). Free reshape.
    return ct, score[..., None]


def _reference(ht, att):
    s = jnp.squeeze(jnp.matmul(ht, att), axis=-1)            # (B, T)
    p = jax.nn.softmax(s, axis=-1)[..., None]                # (B, T, 1)
    ct = jnp.sum(ht * p, axis=1)                             # (B, E)
    return ct, p


if __name__ == "__main__":
    B, T, E = 2, 8, 32

    key = jax.random.PRNGKey(0)
    k_ht, k_att = jax.random.split(key)

    ht = jax.random.normal(k_ht, (B, T, E), dtype=jnp.float32)

    # xavier_normal_ init for att of shape (E, 1): std = sqrt(2 / (fan_in + fan_out))
    std = (2.0 / (E + 1)) ** 0.5
    att = std * jax.random.normal(k_att, (E, 1), dtype=jnp.float32)

    ct, score = attention_pool(ht, att)
    jax.block_until_ready((ct, score))

    ct_ref, score_ref = _reference(ht, att)
    assert jnp.allclose(ct, ct_ref, atol=1e-4, rtol=1e-4), "ct mismatch"
    assert jnp.allclose(score, score_ref, atol=1e-4, rtol=1e-4), "score mismatch"

    print("KERNEL_OK")
</pallas_src>

<mosaic_0001>
module attributes {stable_mosaic.version = 11 : i64} {
  func.func @_attention_kernel(%arg0: i32, %arg1: memref<2x8x32xf32, #tpu.memory_space<vmem>>, %arg2: memref<1x32xf32, #tpu.memory_space<vmem>>, %arg3: memref<2x32xf32, #tpu.memory_space<vmem>>, %arg4: memref<2x8xf32, #tpu.memory_space<vmem>>) attributes {dimension_semantics = [#tpu.dimension_semantics<parallel>], iteration_bounds = array<i64: 1>, scalar_prefetch = 0 : i64, scratch_operands = 0 : i64, tpu.core_type = #tpu.core_type<tc>, window_params = [{transform_indices = @transform_0, window_bounds = array<i64: 2, 8, 32>}, {pipeline_mode = #tpu.pipeline_mode<synchronous>, transform_indices = @transform_1, window_bounds = array<i64: 1, 32>}, {transform_indices = @transform_2, window_bounds = array<i64: 2, 32>}, {transform_indices = @transform_3, window_bounds = array<i64: 2, 8>}]} {
    %c0 = arith.constant 0 : index
    %c0_0 = arith.constant 0 : index
    %c0_1 = arith.constant 0 : index
    %0 = vector.load %arg1[%c0, %c0_0, %c0_1] : memref<2x8x32xf32, #tpu.memory_space<vmem>>, vector<2x8x32xf32>
    %c0_2 = arith.constant 0 : index
    %c0_3 = arith.constant 0 : index
    %1 = vector.load %arg2[%c0_2, %c0_3] : memref<1x32xf32, #tpu.memory_space<vmem>>, vector<1x32xf32>
    %2 = vector.shape_cast %1 : vector<1x32xf32> to vector<1x1x32xf32>
    %3 = vector.broadcast %2 : vector<1x1x32xf32> to vector<2x8x32xf32>
    %4 = arith.mulf %0, %3 : vector<2x8x32xf32>
    %cst = arith.constant dense<0.000000e+00> : vector<2x8xf32>
    %5 = vector.multi_reduction <add>, %4, %cst [2] : vector<2x8x32xf32> to vector<2x8xf32>
    %cst_4 = arith.constant dense<0xFF800000> : vector<2xf32>
    %6 = vector.multi_reduction <maximumf>, %5, %cst_4 [1] : vector<2x8xf32> to vector<2xf32>
    %7 = vector.shape_cast %6 : vector<2xf32> to vector<2x1xf32>
    %8 = vector.broadcast %7 : vector<2x1xf32> to vector<2x8xf32>
    %9 = arith.subf %5, %8 : vector<2x8xf32>
    %10 = math.exp %9 : vector<2x8xf32>
    %cst_5 = arith.constant dense<0.000000e+00> : vector<2xf32>
    %11 = vector.multi_reduction <add>, %10, %cst_5 [1] : vector<2x8xf32> to vector<2xf32>
    %12 = vector.shape_cast %11 : vector<2xf32> to vector<2x1xf32>
    %13 = vector.broadcast %12 : vector<2x1xf32> to vector<2x8xf32>
    %14 = arith.divf %10, %13 : vector<2x8xf32>
    %c0_6 = arith.constant 0 : index
    %c0_7 = arith.constant 0 : index
    %15 = vector.load %arg4[%c0_6, %c0_7] : memref<2x8xf32, #tpu.memory_space<vmem>>, vector<2x8xf32>
    tpu.vector_store %arg4[%c0_6, %c0_7], %14 {strides = array<i32>} : memref<2x8xf32, #tpu.memory_space<vmem>>, vector<2x8xf32>,
    %16 = vector.shape_cast %14 : vector<2x8xf32> to vector<2x8x1xf32>
    %17 = vector.broadcast %16 : vector<2x8x1xf32> to vector<2x8x32xf32>
    %18 = arith.mulf %0, %17 : vector<2x8x32xf32>
    %cst_8 = arith.constant dense<0.000000e+00> : vector<2x32xf32>
    %19 = vector.multi_reduction <add>, %18, %cst_8 [1] : vector<2x8x32xf32> to vector<2x32xf32>
    %c0_9 = arith.constant 0 : index
    %c0_10 = arith.constant 0 : index
    %20 = vector.load %arg3[%c0_9, %c0_10] : memref<2x32xf32, #tpu.memory_space<vmem>>, vector<2x32xf32>
    tpu.vector_store %arg3[%c0_9, %c0_10], %19 {strides = array<i32>} : memref<2x32xf32, #tpu.memory_space<vmem>>, vector<2x32xf32>,
    return
  }
  func.func @transform_0(%arg0: i32) -> (i32, i32, i32) {
    %c0_i32 = arith.constant 0 : i32
    %c0_i32_0 = arith.constant 0 : i32
    %c0_i32_1 = arith.constant 0 : i32
    return %arg0, %c0_i32, %c0_i32_0 : i32, i32, i32
  }
  func.func @transform_1(%arg0: i32) -> (i32, i32) {
    %c0_i32 = arith.constant 0 : i32
    %c0_i32_0 = arith.constant 0 : i32
    %c0_i32_1 = arith.constant 0 : i32
    return %c0_i32, %c0_i32_0 : i32, i32
  }
  func.func @transform_2(%arg0: i32) -> (i32, i32) {
    %c0_i32 = arith.constant 0 : i32
    %c0_i32_0 = arith.constant 0 : i32
    return %arg0, %c0_i32 : i32, i32
  }
  func.func @transform_3(%arg0: i32) -> (i32, i32) {
    %c0_i32 = arith.constant 0 : i32
    %c0_i32_0 = arith.constant 0 : i32
    return %arg0, %c0_i32 : i32, i32
  }
}

</mosaic_0001>

<llo_original>
// kernel: tpu_custom_call.1
$region0: #{tpu_custom_call.1}
  #allocation0 [shape = 'u32[]', space=smem, size = 0x4, offset = 0x4, fixed_abs, tag = 'smem constant byte address 0x4 - core index']
  #allocation1 [shape = 'u32[72,128]{1,0:T(1,128)}', space=vmem, size = 0x9000, scoped, tag = 'internal scratch']
  %s0 = inlined_call_operand.hbm [shape: f32[2,8,32], index: 0, kind: input, shape index: {}]
  %s1 = inlined_call_operand.hbm [shape: f32[1,32], index: 1, kind: input, shape index: {}]
  %s2 = inlined_call_operand.hbm [shape: f32[2,32], index: 2, kind: output, shape index: {0}]
  %s3 = inlined_call_operand.hbm [shape: f32[2,8], index: 3, kind: output, shape index: {1}]
  %4 = xla_tuple %s2, %s3
  %s5 = sld [smem:[#allocation0]]
  $region34: #{tpu_custom_call.1} parent=0
    _
  %s7 = ssub.s32 1, %s5
  %s8 = scalar_select 0, %s7, %s5
  $region1: #{tpu_custom_call.1} parent=0
    #allocation2 [shape = 'u8[8192]{0}', space=vmem, size = 0x2000, scoped, tag = 'input window, operand 0, single buffered']
    #allocation3 [shape = 's32[1]{0}', space=sflag, size = 0x4, scoped, tag = 'scoped memory for tpu_custom_call.1']
    #allocation4 [shape = 's32[1]{0}', space=sflag, size = 0x4, scoped, tag = 'scoped memory for tpu_custom_call.1']
    #allocation5 [shape = 'u8[512]{0}', space=vmem, size = 0x400, scoped, tag = 'input window, operand 1, single buffered']
    #allocation6 [shape = 's32[1]{0}', space=sflag, size = 0x4, scoped, tag = 'scoped memory for tpu_custom_call.1']
    #allocation7 [shape = 'u8[1024]{0}', space=vmem, size = 0x400, scoped, tag = 'output window, operand 0, single buffered']
    #allocation8 [shape = 'u8[1024]{0}', space=vmem, size = 0x400, scoped, tag = 'output window, operand 1, single buffered']
    #allocation9 [shape = 's32[1]{0}', space=sflag, size = 0x4, scoped, tag = 'scoped memory for tpu_custom_call.1']
    %9 = vsyncpa [#allocation3], 0
    %10 = vsyncpa [#allocation6], 0
    %11 = vsyncpa [#allocation4], 0
    %12 = vsyncpa [#allocation9], 0
    // Predicated region
    $region2: #{tpu_custom_call.1} parent=1 // pred_check
      _
    $region3: #{tpu_custom_call.1} parent=1 // pred_check_branch
      %14 = sbr.rel (0) target = $region5
    $region4: #{tpu_custom_call.1} parent=1 // pred_region
      %16 = vsyncadd [#allocation3], 0
      %s17 = sshll.u32 %s0, 4
      %s18 = int_to_ptr.hbm [resolvable:$true] %s17
      %s19 = sshll.u32 [#allocation2], 4
      %s20 = int_to_ptr.vmem [resolvable:$true] %s19
      %25 = dma.hbm_to_vmem [thread:$0]  %s18, 256, %s20, [#allocation3], 128, 128, 8
    $region5: #{tpu_custom_call.1} parent=1 // pred_fallthru
      _
    // Predicated region
    $region6: #{tpu_custom_call.1} parent=1 // pred_check
      _
    $region7: #{tpu_custom_call.1} parent=1 // pred_check_branch
      %27 = sbr.rel (0) target = $region9
    $region8: #{tpu_custom_call.1} parent=1 // pred_region
      %29 = vsyncadd [#allocation6], 0
      %s31 = sshll.u32 %s1, 4
      %s32 = int_to_ptr.hbm [resolvable:$true] %s31
      %s33 = sshll.u32 [#allocation5], 4
      %s34 = int_to_ptr.vmem [resolvable:$true] %s33
      %36 = dma.hbm_to_vmem [thread:$0]  %s32, 16, %s34, [#allocation6]
    $region9: #{tpu_custom_call.1} parent=1 // pred_fallthru
      _
    // Predicated region
    $region10: #{tpu_custom_call.1} parent=1 // pred_check
      _
    $region11: #{tpu_custom_call.1} parent=1 // pred_check_branch
      %38 = sbr.rel (0) target = $region13
    $region12: #{tpu_custom_call.1} parent=1 // pred_region
      %40 = dma.done [#allocation3], 256
    $region13: #{tpu_custom_call.1} parent=1 // pred_fallthru
      _
    // Predicated region
    $region14: #{tpu_custom_call.1} parent=1 // pred_check
      _
    $region15: #{tpu_custom_call.1} parent=1 // pred_check_branch
      %42 = sbr.rel (0) target = $region17
    $region16: #{tpu_custom_call.1} parent=1 // pred_region
      %44 = dma.done [#allocation6], 16
    $region17: #{tpu_custom_call.1} parent=1 // pred_fallthru
      _
    %v45 = vld [vmem:[#allocation2] sm:$0xff]
    %v46 = vld [vmem:[#allocation2 + $0x8] sm:$0xff]
    %v47 = vld [vmem:[#allocation5] sm:$0x1]
    %v49 = vperm.slane %v47, 0
    %v51 = vmul.f32 %v45, %v49
    %v52 = vmul.f32 %v46, %v49
    %vm53 = vcmask 261120
    %v54 = vsel %vm53, %v51, 0.0
    %55 = vadd.xlane.f32.xlu0 %v54
    %v56 = vpop.xlane.xlu0 %55
    %v57 = vsel %vm53, %v52, 0.0
    %58 = vadd.xlane.f32.xlu0 %v57
    %v59 = vpop.xlane.xlu0 %58
    %v62 = vlaneseq
    %v63 = vand.u32 %v62, 127
    %v64 = vperm.slane %v56, %v63
    %v65 = vperm.slane %v59, %v63
    %vm66 = vcmask 1041409
    %v67 = vsel %vm66, %v65, %v64
    %vm69 = vcmask 58368
    %v70 = vsel %vm69, %v67, -inf
    %71 = vmax.xlane.f32.xlu0 %v70
    %v72 = vpop.xlane.xlu0 %71
    %v74 = vperm.slane %v72, 0
    %v75 = vperm.slane %v72, 1
    %v78 = vsub.f32 %v56, %v74
    %v79 = vsub.f32 %v59, %v75
    %v80 = vmul.f32 %v78, 1.442695
    %v81 = vpow.pop %v80
    %v82 = vmul.f32 %v79, 1.442695
    %v83 = vpow.pop %v82
    %86 = vset.pattern.permute.xlu0 0
    %87 = vperm.xlu0 %86, %v81
    %v88 = vpop.permute.xlu0 %87
    %89 = vset.pattern.permute.xlu0 0
    %90 = vperm.xlu0 %89, %v83
    %v91 = vpop.permute.xlu0 %90
    %v92 = vperm.slane %v88, %v63
    %v93 = vperm.slane %v91, %v63
    %v94 = vsel %vm66, %v93, %v92
    %v96 = vsel %vm69, %v94, 0.0
    %97 = vadd.xlane.f32.xlu0 %v96
    %v98 = vpop.xlane.xlu0 %97
    %v100 = vperm.slane %v98, 0
    %v101 = vperm.slane %v98, 1
    %v104 = vrcp.pop %v100
    %v105 = vmul.f32 %v100, %v104
    %v106 = vsub.f32 1.0, %v105
    %v107 = vmul.f32 %v104, %v106
    %v108 = vadd.f32 %v104, %v107
    %vm109 = vweird.f32 %v100
    %vm110 = vweird.f32 %v104
    %vm111 = vmor %vm109, %vm110
    %v112 = vsel %vm111, %v104, %v108
    %v113 = vand.u32 2147483647, %v100
    %vm114 = vcmp.eq.f32.partialorder %v113, 8.507059e+37
    %v115 = vand.u32 %v100, 2147483648
    %v116 = vor.u32 1.1754944e-38, %v115
    %v117 = vsel %vm114, %v116, %v112
    %v118 = vmul.f32 %v81, %v117
    %v119 = vrcp.pop %v101
    %v120 = vmul.f32 %v101, %v119
    %v121 = vsub.f32 1.0, %v120
    %v122 = vmul.f32 %v119, %v121
    %v123 = vadd.f32 %v119, %v122
    %vm124 = vweird.f32 %v101
    %vm125 = vweird.f32 %v119
    %vm126 = vmor %vm124, %vm125
    %v127 = vsel %vm126, %v119, %v123
    %v128 = vand.u32 2147483647, %v101
    %vm129 = vcmp.eq.f32.partialorder %v128, 8.507059e+37
    %v130 = vand.u32 %v101, 2147483648
    %v131 = vor.u32 1.1754944e-38, %v130
    %v132 = vsel %vm129, %v131, %v127
    %v133 = vmul.f32 %v83, %v132
    %136 = vset.pattern.permute.xlu0 0
    %137 = vperm.xlu0 %136, %v118
    %v138 = vpop.permute.xlu0 %137
    %139 = vset.pattern.permute.xlu0 0
    %140 = vperm.xlu0 %139, %v133
    %v141 = vpop.permute.xlu0 %140
    %v142 = vperm.slane %v138, %v63
    %v143 = vperm.slane %v141, %v63
    %v144 = vsel %vm66, %v143, %v142
    %146 = vst.msk [vmem:[#allocation8] sm:$0x3] %vm69, %v144
    %v149 = vmul.f32 %v45, %v138
    %v150 = vmul.f32 %v46, %v141
    %v151 = vsel %vm53, %v149, 0.0
    %v152 = vrot.slane %v151, 4
    %v153 = vadd.f32 %v151, %v152
    %v154 = vrot.slane %v153, 2
    %v155 = vadd.f32 %v153, %v154
    %v156 = vrot.slane %v155, 1
    %v157 = vadd.f32 %v155, %v156
    %v158 = vsel %vm53, %v150, 0.0
    %v159 = vrot.slane %v158, 4
    %v160 = vadd.f32 %v158, %v159
    %v161 = vrot.slane %v160, 2
    %v162 = vadd.f32 %v160, %v161
    %v163 = vrot.slane %v162, 1
    %v164 = vadd.f32 %v162, %v163
    %v167 = vsel %vm66, %v164, %v157
    %vm169 = vcmask 254976
    %170 = vst.msk [vmem:[#allocation7] sm:$0x3] %vm169, %v167
    // Predicated region
    $region18: #{tpu_custom_call.1} parent=1 // pred_check
      _
    $region19: #{tpu_custom_call.1} parent=1 // pred_check_branch
      %172 = sbr.rel (0) target = $region21
    $region20: #{tpu_custom_call.1} parent=1 // pred_region
      %174 = vsyncadd [#allocation4], 0
      %s176 = sshll.u32 [#allocation7], 4
      %s177 = int_to_ptr.vmem [resolvable:$true] %s176
      %s178 = sshll.u32 %s2, 4
      %s179 = int_to_ptr.hbm [resolvable:$true] %s178
      %181 = dma.vmem_to_hbm [thread:$0]  %s177, 32, %s179, [#allocation4]
    $region21: #{tpu_custom_call.1} parent=1 // pred_fallthru
      _
    // Predicated region
    $region22: #{tpu_custom_call.1} parent=1 // pred_check
      _
    $region23: #{tpu_custom_call.1} parent=1 // pred_check_branch
      %183 = sbr.rel (0) target = $region25
    $region24: #{tpu_custom_call.1} parent=1 // pred_region
      %185 = vsyncadd [#allocation9], 0
      %s187 = sshll.u32 [#allocation8], 4
      %s188 = int_to_ptr.vmem [resolvable:$true] %s187
      %s189 = sshll.u32 %s3, 4
      %s190 = int_to_ptr.hbm [resolvable:$true] %s189
      %192 = dma.vmem_to_hbm [thread:$0]  %s188, 32, %s190, [#allocation9]
    $region25: #{tpu_custom_call.1} parent=1 // pred_fallthru
      _
    // Predicated region
    $region26: #{tpu_custom_call.1} parent=1 // pred_check
      _
    $region27: #{tpu_custom_call.1} parent=1 // pred_check_branch
      %194 = sbr.rel (0) target = $region29
    $region28: #{tpu_custom_call.1} parent=1 // pred_region
      %196 = dma.done [#allocation4], 32
    $region29: #{tpu_custom_call.1} parent=1 // pred_fallthru
      _
    // Predicated region
    $region30: #{tpu_custom_call.1} parent=1 // pred_check
      _
    $region31: #{tpu_custom_call.1} parent=1 // pred_check_branch
      %198 = sbr.rel (0) target = $region33
    $region32: #{tpu_custom_call.1} parent=1 // pred_region
      %200 = dma.done [#allocation9], 32
    $region33: #{tpu_custom_call.1} parent=1 // pred_fallthru
      _
    %201 = vsyncpa [#allocation3], 1
    %202 = vsyncpa [#allocation6], 1
    %203 = vsyncpa [#allocation4], 1
    %204 = vsyncpa [#allocation9], 1

</llo_original>
